<compile_context>
chip_gen: v5e
topology: v5e:2x2
jax: 0.10.0
libtpu: 0.0.40
codegen_flags: <defaults>
</compile_context>

<pallas_src>
import functools

import jax
import jax.numpy as jnp
from jax import lax
from jax.experimental import pallas as pl
from jax.experimental.pallas import tpu as pltpu

BN_EPS = 1e-5


def _round_up(x, m):
    return (x + m - 1) // m * m


def _num_tensorcores():
    """Rough TensorCore-per-chip count (only used as a tiling score bonus)."""
    try:
        kind = jax.devices()[0].device_kind.lower()
    except Exception:
        return 1
    if "v7" in kind or "v4" in kind or "v5p" in kind:
        return 2
    return 1


# ---------------------------------------------------------------------------
# Hot path kernel: points block [bm, tn, 3] -> running-max feature [bm, K]
# ---------------------------------------------------------------------------
def _pointnet_hot_kernel(x_ref, w1_ref, t1_ref, w2_ref, t2_ref, w3_ref, t3_ref,
                         feat_ref, acc_ref, *, bm, tn):
    """Grid = (batch blocks, N chunks).  Per step: M = bm*tn rows through the
    3-layer MLP, then a partial max over the tn points of this chunk is folded
    into a per-batch-block running max (acc_ref, VMEM scratch).

    x_ref:  [bm, tn, 3]  f32 points (channels-last)
    w1_ref: [3, 64]      f32 scale-folded layer-1 weight (MXU, f32)
    w2_ref: [64, 128]    bf16 scale-folded layer-2 weight (MXU)
    w3_ref: [128, K]     bf16 scale-folded layer-3 weight (MXU)
    t*_ref: [1, C]       f32 folded shift = beta - mean*scale + scale*bias
    feat_ref: [bm, K]    f32 pooled feature (written on last N chunk)
    acc_ref:  [bm, K]    f32 running max scratch
    """
    j = pl.program_id(1)
    m = bm * tn

    # tn % 8 == 0 -> merging (bm, tn) into one sublane dim is a free reshape.
    x = x_ref[...].reshape(m, 3)                                   # [M, 3] f32

    # mlp1: Conv1d(3->64,k=1)+BN+ReLU as an f32 MXU dot.  The K=3 underfill is
    # negligible (the MXU is otherwise idle here) and it keeps the lane
    # extract/broadcast work off the VPU/XLU critical path.
    h1 = jnp.dot(x, w1_ref[...], preferred_element_type=jnp.float32) + t1_ref[...]
    h1 = jnp.maximum(h1, 0.0)                                      # [M, 64]

    # mlp2: bf16 MXU matmul, f32 accumulate, folded BN + ReLU in f32.
    h2 = jnp.dot(h1.astype(jnp.bfloat16), w2_ref[...],
                 preferred_element_type=jnp.float32) + t2_ref[...]
    h2 = jnp.maximum(h2, 0.0)                                      # [M, 128]

    # mlp3
    h3 = jnp.dot(h2.astype(jnp.bfloat16), w3_ref[...],
                 preferred_element_type=jnp.float32) + t3_ref[...]
    h3 = jnp.maximum(h3, 0.0)                                      # [M, K]

    k = h3.shape[1]
    part = jnp.max(h3.reshape(bm, tn, k), axis=1)                  # [bm, K]

    @pl.when(j == 0)
    def _():
        acc_ref[...] = jnp.full_like(acc_ref, -jnp.inf)

    acc_ref[...] = jnp.maximum(acc_ref[...], part)

    @pl.when(j == pl.num_programs(1) - 1)
    def _():
        feat_ref[...] = acc_ref[...]


def _hot_step_vmem_bytes(bm, tn, k):
    """Conservative per-grid-step VMEM estimate (double-buffered blocks +
    live f32/bf16 intermediates).  The compiler reuses some of these, so this
    over-counts slightly — which is the safe direction."""
    m = bm * tn
    # x input block, lane-padded 3 -> 128, double-buffered
    x_buf = bm * _round_up(tn, 8) * 128 * 4 * 2
    # weights / shifts (w1 f32, w2/w3 bf16), double-buffered
    w_buf = 2 * ((3 * 64) * 4 + (64 * 128 + 128 * k) * 2 + (64 + 128 + k) * 4)
    # output block (double-buffered) + accumulator scratch
    o_buf = _round_up(bm, 8) * _round_up(k, 128) * 4 * 3
    # live intermediates: padded x view, h1/h2 (f32 + bf16), h3 (f32)
    inter = m * (128 * 4
                 + 64 * 4 + 64 * 2
                 + 128 * 4 + 128 * 2
                 + _round_up(k, 128) * 4)
    return x_buf + w_buf + o_buf + inter


def _choose_hot_tiles(batch, n_pad, k, n_cores):
    """Pick (bm, tn): bm | batch, tn | n_pad with tn % 8 == 0.

    Targets M = bm*tn ~ 2048 rows per step (amortize ~0.35us step overhead,
    fill the MXU) under a ~10 MiB VMEM budget (fits v5e's 16 MiB default
    scoped VMEM and v7x's 32 MiB).  No forced minimum step count on 1-TC
    chips; bm % 8 == 0 and a core-count-divisible batch-block count are only
    scoring bonuses.
    """
    target_m = 2048
    budget = 10 * 1024 * 1024

    bms = [d for d in range(1, batch + 1) if batch % d == 0]
    tns = [d for d in range(8, n_pad + 1, 8) if n_pad % d == 0]
    if not tns:                      # n_pad is always a multiple of 8, so
        tns = [n_pad]                # this is just belt-and-braces.

    best = None
    for bm in bms:
        for tn in tns:
            if _hot_step_vmem_bytes(bm, tn, k) > budget:
                continue
            m = bm * tn
            score = -abs(m - target_m) / float(target_m)
            if bm % 8 == 0:
                score += 0.25        # (8,128)-aligned [bm, K] output tile
            if n_cores > 1 and (batch // bm) % n_cores == 0:
                score += 0.25        # even batch-block count across TCs
            if best is None or score > best[0]:
                best = (score, bm, tn)
    if best is None:
        return 1, min(tns)
    return best[1], best[2]


def _fuse_hot_params(params):
    """Fold conv bias + eval-mode BN into (weight, shift) per layer.

    relu(bn(x @ w + b)) == relu(x @ (w*s) + (t + b*s)).
    MXU-layer weights for layers 2/3 are cast to bf16 once here.
    """
    fused = []
    for li, (w, b, s, t) in enumerate(params):
        wf = w * s                      # [Cin, Cout] * [1, Cout]
        tf = t + b * s                  # [1, Cout]
        if li > 0:
            wf = wf.astype(jnp.bfloat16)
        fused.append((wf, tf))
    return tuple(fused)


# Cache the folded/cast parameters across forward calls (keyed on the params
# object; the stored reference keeps the id valid).
_FUSE_CACHE = {}


def _fused_params_cached(params):
    key = id(params)
    hit = _FUSE_CACHE.get(key)
    if hit is not None and hit[0] is params:
        return hit[1]
    fused = _fuse_hot_params(params)
    _FUSE_CACHE[key] = (params, fused)
    return fused


def _run_hot(points, fused):
    B, N, _ = points.shape
    (w1, t1), (w2, t2), (w3, t3) = fused
    k = w3.shape[1]

    # Pad N to a multiple of 8 by replicating the last point: the max-pool is
    # unchanged and in-kernel reshapes stay sublane-tile aligned.
    n_pad = _round_up(N, 8)
    if n_pad != N:
        pad = jnp.broadcast_to(points[:, N - 1:N, :], (B, n_pad - N, 3))
        points = jnp.concatenate([points, pad], axis=1)

    bm, tn = _choose_hot_tiles(B, n_pad, k, _num_tensorcores())
    kernel = functools.partial(_pointnet_hot_kernel, bm=bm, tn=tn)

    def rep(a):
        nd = a.ndim
        return pl.BlockSpec(a.shape, lambda i, j, _nd=nd: (0,) * _nd)

    return pl.pallas_call(
        kernel,
        grid=(B // bm, n_pad // tn),
        in_specs=[
            pl.BlockSpec((bm, tn, 3), lambda i, j: (i, j, 0)),
            rep(w1), rep(t1), rep(w2), rep(t2), rep(w3), rep(t3),
        ],
        out_specs=pl.BlockSpec((bm, k), lambda i, j: (i, 0)),
        out_shape=jax.ShapeDtypeStruct((B, k), jnp.float32),
        scratch_shapes=[pltpu.VMEM((bm, k), jnp.float32)],
        compiler_params=pltpu.CompilerParams(
            dimension_semantics=("parallel", "arbitrary")),
    )(points, w1, t1, w2, t2, w3, t3)


# ---------------------------------------------------------------------------
# Debug path kernel (iter == -1): f32, also emits pre-BN activations + argmax
# ---------------------------------------------------------------------------
def _pointnet_debug_kernel(x_ref,
                           w1_ref, b1_ref, s1_ref, t1_ref,
                           w2_ref, b2_ref, s2_ref, t2_ref,
                           w3_ref, b3_ref, s3_ref, t3_ref,
                           feat_ref, a1_ref, a2_ref, a3_ref, idx_ref):
    """One batch element per grid step; f32 end-to-end for comparison.

    TODO(synk): the 64-lane a1 output lowers to masked partial stores; this is
    acceptable because the debug path is not performance critical.
    """
    x = x_ref[0]                                                   # [N, 3]

    a1 = jnp.dot(x, w1_ref[...], preferred_element_type=jnp.float32) + b1_ref[...]
    a1_ref[0] = a1
    h1 = jnp.maximum(a1 * s1_ref[...] + t1_ref[...], 0.0)          # [N, 64]

    a2 = jnp.dot(h1, w2_ref[...], preferred_element_type=jnp.float32) + b2_ref[...]
    a2_ref[0] = a2
    h2 = jnp.maximum(a2 * s2_ref[...] + t2_ref[...], 0.0)          # [N, 128]

    a3 = jnp.dot(h2, w3_ref[...], preferred_element_type=jnp.float32) + b3_ref[...]
    a3_ref[0] = a3
    h3 = jnp.maximum(a3 * s3_ref[...] + t3_ref[...], 0.0)          # [N, K]

    maxv = jnp.max(h3, axis=0, keepdims=True)                      # [1, K]
    feat_ref[...] = maxv

    n = h3.shape[0]
    ids = lax.broadcasted_iota(jnp.int32, h3.shape, 0)              # [N, K]
    idx_ref[...] = jnp.min(jnp.where(h3 == maxv, ids, n), axis=0, keepdims=True)


def _run_debug(points, params):
    B, N, _ = points.shape
    (w1, b1, s1, t1), (w2, b2, s2, t2), (w3, b3, s3, t3) = params
    c1, c2, c3 = w1.shape[1], w2.shape[1], w3.shape[1]

    def rep(a):
        nd = a.ndim
        return pl.BlockSpec(a.shape, lambda b, _nd=nd: (0,) * _nd)

    flat_params = (w1, b1, s1, t1, w2, b2, s2, t2, w3, b3, s3, t3)
    in_specs = [pl.BlockSpec((1, N, 3), lambda b: (b, 0, 0))]
    in_specs += [rep(p) for p in flat_params]

    out_shape = (
        jax.ShapeDtypeStruct((B, c3), jnp.float32),       # pooled feature [B, K]
        jax.ShapeDtypeStruct((B, N, c1), jnp.float32),    # A1_x (pre-BN)
        jax.ShapeDtypeStruct((B, N, c2), jnp.float32),    # A2_x
        jax.ShapeDtypeStruct((B, N, c3), jnp.float32),    # A3_x
        jax.ShapeDtypeStruct((B, c3), jnp.int32),         # max_idx
    )
    out_specs = (
        pl.BlockSpec((1, c3), lambda b: (b, 0)),
        pl.BlockSpec((1, N, c1), lambda b: (b, 0, 0)),
        pl.BlockSpec((1, N, c2), lambda b: (b, 0, 0)),
        pl.BlockSpec((1, N, c3), lambda b: (b, 0, 0)),
        pl.BlockSpec((1, c3), lambda b: (b, 0)),
    )

    return pl.pallas_call(
        _pointnet_debug_kernel,
        grid=(B,),
        in_specs=in_specs,
        out_specs=out_specs,
        out_shape=out_shape,
        compiler_params=pltpu.CompilerParams(dimension_semantics=("parallel",)),
    )(points, *flat_params)


# ---------------------------------------------------------------------------
# Parameters & public forward
# ---------------------------------------------------------------------------
def init_params(key, dim_k=128):
    """Deterministic synthetic parameters matching the torch module's shapes.

    Conv1d(cin -> cout, k=1): weight [cout, cin, 1] (stored transposed as
    [cin, cout]), bias [cout].  BatchNorm1d(cout): gamma/beta/running stats
    folded into a single scale/shift pair (eval-mode BN).
    """
    dims = [(3, 64), (64, 128), (128, dim_k)]
    params = []
    for i, (cin, cout) in enumerate(dims):
        k = jax.random.fold_in(key, i)
        kw, kb, kg, kbe, km, kv = jax.random.split(k, 6)
        bound = 1.0 / float(cin) ** 0.5
        w = jax.random.uniform(kw, (cin, cout), jnp.float32, -bound, bound)
        b = jax.random.uniform(kb, (1, cout), jnp.float32, -bound, bound)
        gamma = jax.random.uniform(kg, (1, cout), jnp.float32, 0.5, 1.5)
        beta = jax.random.uniform(kbe, (1, cout), jnp.float32, -0.5, 0.5)
        mean = 0.1 * jax.random.normal(km, (1, cout), jnp.float32)
        var = jax.random.uniform(kv, (1, cout), jnp.float32, 0.5, 1.5)
        scale = gamma / jnp.sqrt(var + BN_EPS)
        shift = beta - mean * scale
        params.append((w, b, scale, shift))
    return params


def pointnet_features_forward(points, params, iter):
    """[B, N, 3] -> [B, K]  (or the full torch debug tuple when iter == -1)."""
    if iter != -1:
        fused = _fused_params_cached(params)
        return _run_hot(points, fused)

    feat, a1, a2, a3, max_idx = _run_debug(points, params)

    # glue: reconstruct torch-layout ([B, C, N]) debug tensors (elementwise only).
    (w1, _, s1, t1), (w2, _, s2, t2), (w3, _, s3, t3) = params

    def bn_and_mask(a, s, t):
        bn = a * s + t                                   # [B, N, C]
        m = (bn > 0).astype(jnp.float32)                 # ReLU mask (x > 0)
        return jnp.transpose(bn, (0, 2, 1)), jnp.transpose(m, (0, 2, 1))

    bn1, m1 = bn_and_mask(a1, s1, t1)
    bn2, m2 = bn_and_mask(a2, s2, t2)
    bn3, m3 = bn_and_mask(a3, s3, t3)

    # torch Conv1d weight layout: [Cout, Cin, 1]
    A1 = jnp.transpose(w1)[:, :, None]
    A2 = jnp.transpose(w2)[:, :, None]
    A3 = jnp.transpose(w3)[:, :, None]

    A1_x = jnp.transpose(a1, (0, 2, 1))
    A2_x = jnp.transpose(a2, (0, 2, 1))
    A3_x = jnp.transpose(a3, (0, 2, 1))

    return (feat, [m1, m2, m3], [A1, A2, A3],
            [A1_x, A2_x, A3_x], [bn1, bn2, bn3], max_idx)


if __name__ == "__main__":
    key = jax.random.PRNGKey(0)
    kp, kparam = jax.random.split(key)

    B, N, dim_k = 2, 128, 128              # small, TPU-tile-friendly shapes
    points = jax.random.normal(kp, (B, N, 3), jnp.float32)
    params = init_params(kparam, dim_k=dim_k)

    # hot path (iter != -1): [B, N, 3] -> [B, K]
    feat = pointnet_features_forward(points, params, iter=0)
    # second call exercises the fused-params cache
    feat2 = pointnet_features_forward(points, params, iter=1)
    # debug path (iter == -1): full tuple
    dbg = pointnet_features_forward(points, params, iter=-1)

    jax.block_until_ready(feat)
    jax.block_until_ready(feat2)
    jax.block_until_ready(dbg)

    # pure-JAX f32 reference for the forward pass
    def ref_forward(pts):
        h = pts
        for (w, b, s, t) in params:
            h = jnp.einsum("bnc,cd->bnd", h, w,
                           precision=lax.Precision.HIGHEST) + b
            h = jnp.maximum(h * s + t, 0.0)
        return jnp.max(h, axis=1)

    feat_ref = ref_forward(points)

    assert feat.shape == (B, dim_k)
    # hot path uses bf16 matmuls for layers 2/3 -> loose tolerance
    assert jnp.allclose(feat, feat_ref, rtol=5e-2, atol=5e-2), \
        float(jnp.max(jnp.abs(feat - feat_ref)))
    assert jnp.allclose(feat2, feat, rtol=0, atol=0)
    # debug path is f32 end-to-end -> tighter tolerance
    assert jnp.allclose(dbg[0], feat_ref, rtol=1e-2, atol=1e-2)
    assert dbg[1][0].shape == (B, 64, N) and dbg[3][2].shape == (B, dim_k, N)
    assert dbg[5].shape == (B, dim_k)

    print("KERNEL_OK")
</pallas_src>

<mosaic_0001>
module attributes {stable_mosaic.version = 11 : i64} {
  func.func @_pointnet_hot_kernel(%arg0: i32, %arg1: i32, %arg2: memref<2x128x3xf32, #tpu.memory_space<vmem>>, %arg3: memref<3x64xf32, #tpu.memory_space<vmem>>, %arg4: memref<1x64xf32, #tpu.memory_space<vmem>>, %arg5: memref<64x128xbf16, #tpu.memory_space<vmem>>, %arg6: memref<1x128xf32, #tpu.memory_space<vmem>>, %arg7: memref<128x128xbf16, #tpu.memory_space<vmem>>, %arg8: memref<1x128xf32, #tpu.memory_space<vmem>>, %arg9: memref<2x128xf32, #tpu.memory_space<vmem>>, %arg10: memref<2x128xf32, #tpu.memory_space<vmem>>) attributes {dimension_semantics = [#tpu.dimension_semantics<parallel>, #tpu.dimension_semantics<arbitrary>], iteration_bounds = array<i64: 1, 1>, scalar_prefetch = 0 : i64, scratch_operands = 1 : i64, tpu.core_type = #tpu.core_type<tc>, window_params = [{transform_indices = @transform_0, window_bounds = array<i64: 2, 128, 3>}, {pipeline_mode = #tpu.pipeline_mode<synchronous>, transform_indices = @transform_1, window_bounds = array<i64: 3, 64>}, {pipeline_mode = #tpu.pipeline_mode<synchronous>, transform_indices = @transform_2, window_bounds = array<i64: 1, 64>}, {pipeline_mode = #tpu.pipeline_mode<synchronous>, transform_indices = @transform_3, window_bounds = array<i64: 64, 128>}, {pipeline_mode = #tpu.pipeline_mode<synchronous>, transform_indices = @transform_4, window_bounds = array<i64: 1, 128>}, {pipeline_mode = #tpu.pipeline_mode<synchronous>, transform_indices = @transform_5, window_bounds = array<i64: 128, 128>}, {pipeline_mode = #tpu.pipeline_mode<synchronous>, transform_indices = @transform_6, window_bounds = array<i64: 1, 128>}, {transform_indices = @transform_7, window_bounds = array<i64: 2, 128>}]} {
    %c0 = arith.constant 0 : index
    %c0_0 = arith.constant 0 : index
    %c0_1 = arith.constant 0 : index
    %0 = vector.load %arg2[%c0, %c0_0, %c0_1] : memref<2x128x3xf32, #tpu.memory_space<vmem>>, vector<2x128x3xf32>
    %1 = vector.shape_cast %0 : vector<2x128x3xf32> to vector<256x3xf32>
    %c0_2 = arith.constant 0 : index
    %c0_3 = arith.constant 0 : index
    %2 = vector.load %arg3[%c0_2, %c0_3] : memref<3x64xf32, #tpu.memory_space<vmem>>, vector<3x64xf32>
    %cst = arith.constant dense<0.000000e+00> : vector<256x64xf32>
    %3 = tpu.matmul %1, %2, %cst {dimension_numbers = #tpu.dot_dimension_numbers<[1], [0], [0], [1], [0, 0, 1, 1], [], []>} : vector<256x3xf32>, vector<3x64xf32>, vector<256x64xf32> -> vector<256x64xf32>
    %c0_4 = arith.constant 0 : index
    %c0_5 = arith.constant 0 : index
    %4 = vector.load %arg4[%c0_4, %c0_5] : memref<1x64xf32, #tpu.memory_space<vmem>>, vector<1x64xf32>
    %5 = vector.broadcast %4 : vector<1x64xf32> to vector<256x64xf32>
    %6 = arith.addf %3, %5 : vector<256x64xf32>
    %cst_6 = arith.constant 0.000000e+00 : f32
    %7 = vector.broadcast %cst_6 : f32 to vector<256x64xf32>
    %8 = arith.maximumf %6, %7 : vector<256x64xf32>
    %9 = arith.truncf %8 : vector<256x64xf32> to vector<256x64xbf16>
    %c0_7 = arith.constant 0 : index
    %c0_8 = arith.constant 0 : index
    %10 = vector.load %arg5[%c0_7, %c0_8] : memref<64x128xbf16, #tpu.memory_space<vmem>>, vector<64x128xbf16>
    %cst_9 = arith.constant dense<0.000000e+00> : vector<256x128xf32>
    %11 = tpu.matmul %9, %10, %cst_9 {dimension_numbers = #tpu.dot_dimension_numbers<[1], [0], [0], [1], [0, 0, 1, 1], [], []>} : vector<256x64xbf16>, vector<64x128xbf16>, vector<256x128xf32> -> vector<256x128xf32>
    %c0_10 = arith.constant 0 : index
    %c0_11 = arith.constant 0 : index
    %12 = vector.load %arg6[%c0_10, %c0_11] : memref<1x128xf32, #tpu.memory_space<vmem>>, vector<1x128xf32>
    %13 = vector.broadcast %12 : vector<1x128xf32> to vector<256x128xf32>
    %14 = arith.addf %11, %13 : vector<256x128xf32>
    %cst_12 = arith.constant 0.000000e+00 : f32
    %15 = vector.broadcast %cst_12 : f32 to vector<256x128xf32>
    %16 = arith.maximumf %14, %15 : vector<256x128xf32>
    %17 = arith.truncf %16 : vector<256x128xf32> to vector<256x128xbf16>
    %c0_13 = arith.constant 0 : index
    %c0_14 = arith.constant 0 : index
    %18 = vector.load %arg7[%c0_13, %c0_14] : memref<128x128xbf16, #tpu.memory_space<vmem>>, vector<128x128xbf16>
    %cst_15 = arith.constant dense<0.000000e+00> : vector<256x128xf32>
    %19 = tpu.matmul %17, %18, %cst_15 {dimension_numbers = #tpu.dot_dimension_numbers<[1], [0], [0], [1], [0, 0, 1, 1], [], []>} : vector<256x128xbf16>, vector<128x128xbf16>, vector<256x128xf32> -> vector<256x128xf32>
    %c0_16 = arith.constant 0 : index
    %c0_17 = arith.constant 0 : index
    %20 = vector.load %arg8[%c0_16, %c0_17] : memref<1x128xf32, #tpu.memory_space<vmem>>, vector<1x128xf32>
    %21 = vector.broadcast %20 : vector<1x128xf32> to vector<256x128xf32>
    %22 = arith.addf %19, %21 : vector<256x128xf32>
    %cst_18 = arith.constant 0.000000e+00 : f32
    %23 = vector.broadcast %cst_18 : f32 to vector<256x128xf32>
    %24 = arith.maximumf %22, %23 : vector<256x128xf32>
    %25 = vector.shape_cast %24 : vector<256x128xf32> to vector<2x128x128xf32>
    %cst_19 = arith.constant dense<0xFF800000> : vector<2x128xf32>
    %26 = vector.multi_reduction <maximumf>, %25, %cst_19 [1] : vector<2x128x128xf32> to vector<2x128xf32>
    %c0_i32 = arith.constant 0 : i32
    %27 = arith.cmpi eq, %arg1, %c0_i32 : i32
    %28 = arith.extui %27 : i1 to i32
    %c0_i32_20 = arith.constant 0 : i32
    %29 = arith.cmpi ne, %28, %c0_i32_20 : i32
    scf.if %29 {
      %cst_27 = arith.constant 0xFF800000 : f32
      %36 = vector.broadcast %cst_27 : f32 to vector<2x128xf32>
      %c0_28 = arith.constant 0 : index
      %c0_29 = arith.constant 0 : index
      %37 = vector.load %arg10[%c0_28, %c0_29] : memref<2x128xf32, #tpu.memory_space<vmem>>, vector<2x128xf32>
      tpu.vector_store %arg10[%c0_28, %c0_29], %36 {strides = array<i32>} : memref<2x128xf32, #tpu.memory_space<vmem>>, vector<2x128xf32>,
    } else {
    }
    %c0_21 = arith.constant 0 : index
    %c0_22 = arith.constant 0 : index
    %30 = vector.load %arg10[%c0_21, %c0_22] : memref<2x128xf32, #tpu.memory_space<vmem>>, vector<2x128xf32>
    %31 = arith.maximumf %30, %26 : vector<2x128xf32>
    %c0_23 = arith.constant 0 : index
    %c0_24 = arith.constant 0 : index
    %32 = vector.load %arg10[%c0_23, %c0_24] : memref<2x128xf32, #tpu.memory_space<vmem>>, vector<2x128xf32>
    tpu.vector_store %arg10[%c0_23, %c0_24], %31 {strides = array<i32>} : memref<2x128xf32, #tpu.memory_space<vmem>>, vector<2x128xf32>,
    %c0_i32_25 = arith.constant 0 : i32
    %33 = arith.cmpi eq, %arg1, %c0_i32_25 : i32
    %34 = arith.extui %33 : i1 to i32
    %c0_i32_26 = arith.constant 0 : i32
    %35 = arith.cmpi ne, %34, %c0_i32_26 : i32
    scf.if %35 {
      %c0_27 = arith.constant 0 : index
      %c0_28 = arith.constant 0 : index
      %36 = vector.load %arg10[%c0_27, %c0_28] : memref<2x128xf32, #tpu.memory_space<vmem>>, vector<2x128xf32>
      %c0_29 = arith.constant 0 : index
      %c0_30 = arith.constant 0 : index
      %37 = vector.load %arg9[%c0_29, %c0_30] : memref<2x128xf32, #tpu.memory_space<vmem>>, vector<2x128xf32>
      tpu.vector_store %arg9[%c0_29, %c0_30], %36 {strides = array<i32>} : memref<2x128xf32, #tpu.memory_space<vmem>>, vector<2x128xf32>,
    } else {
    }
    return
  }
  func.func @transform_0(%arg0: i32, %arg1: i32) -> (i32, i32, i32) {
    %c0_i32 = arith.constant 0 : i32
    %c0_i32_0 = arith.constant 0 : i32
    return %arg0, %arg1, %c0_i32 : i32, i32, i32
  }
  func.func @transform_1(%arg0: i32, %arg1: i32) -> (i32, i32) {
    %c0_i32 = arith.constant 0 : i32
    %c0_i32_0 = arith.constant 0 : i32
    %c0_i32_1 = arith.constant 0 : i32
    return %c0_i32, %c0_i32_0 : i32, i32
  }
  func.func @transform_2(%arg0: i32, %arg1: i32) -> (i32, i32) {
    %c0_i32 = arith.constant 0 : i32
    %c0_i32_0 = arith.constant 0 : i32
    %c0_i32_1 = arith.constant 0 : i32
    return %c0_i32, %c0_i32_0 : i32, i32
  }
  func.func @transform_3(%arg0: i32, %arg1: i32) -> (i32, i32) {
    %c0_i32 = arith.constant 0 : i32
    %c0_i32_0 = arith.constant 0 : i32
    %c0_i32_1 = arith.constant 0 : i32
    return %c0_i32, %c0_i32_0 : i32, i32
  }
  func.func @transform_4(%arg0: i32, %arg1: i32) -> (i32, i32) {
    %c0_i32 = arith.constant 0 : i32
    %c0_i32_0 = arith.constant 0 : i32
    %c0_i32_1 = arith.constant 0 : i32
    return %c0_i32, %c0_i32_0 : i32, i32
  }
  func.func @transform_5(%arg0: i32, %arg1: i32) -> (i32, i32) {
    %c0_i32 = arith.constant 0 : i32
    %c0_i32_0 = arith.constant 0 : i32
    %c0_i32_1 = arith.constant 0 : i32
    return %c0_i32, %c0_i32_0 : i32, i32
  }
  func.func @transform_6(%arg0: i32, %arg1: i32) -> (i32, i32) {
    %c0_i32 = arith.constant 0 : i32
    %c0_i32_0 = arith.constant 0 : i32
    %c0_i32_1 = arith.constant 0 : i32
    return %c0_i32, %c0_i32_0 : i32, i32
  }
  func.func @transform_7(%arg0: i32, %arg1: i32) -> (i32, i32) {
    %c0_i32 = arith.constant 0 : i32
    %c0_i32_0 = arith.constant 0 : i32
    return %arg0, %c0_i32 : i32, i32
  }
}

</mosaic_0001>

<llo_original>
// kernel: tpu_custom_call.1
$region0: #{tpu_custom_call.1}
  #allocation0 [shape = 'u32[]', space=smem, size = 0x4, offset = 0x4, fixed_abs, tag = 'smem constant byte address 0x4 - core index']
  #allocation1 [shape = 'u32[72,128]{1,0:T(1,128)}', space=vmem, size = 0x9000, scoped, tag = 'internal scratch']
  #allocation2 [shape = 'f32[2,128]{1,0:T(2,128)}', space=vmem, size = 0x400, scoped, tag = 'scratch operand']
  %s0 = inlined_call_operand.vmem [shape: f32[2,128,3], index: 0, kind: input, shape index: {}]
  %s1 = inlined_call_operand.vmem [shape: f32[3,64], index: 1, kind: input, shape index: {}]
  %s2 = inlined_call_operand.vmem [shape: f32[1,64], index: 2, kind: input, shape index: {}]
  %s3 = inlined_call_operand.vmem [shape: bf16[64,128], index: 3, kind: input, shape index: {}]
  %s4 = inlined_call_operand.vmem [shape: f32[1,128], index: 4, kind: input, shape index: {}]
  %s5 = inlined_call_operand.vmem [shape: bf16[128,128], index: 5, kind: input, shape index: {}]
  %s6 = inlined_call_operand.vmem [shape: f32[1,128], index: 6, kind: input, shape index: {}]
  %s7 = inlined_call_operand.hbm [shape: f32[2,128], index: 7, kind: output, shape index: {}]
  %s8 = sld [smem:[#allocation0]]
  $region46: #{tpu_custom_call.1} parent=0
    _
  %s10 = ssub.s32 1, %s8
  %s11 = scalar_select 0, %s10, %s8
  $region1: #{tpu_custom_call.1} parent=0
    #allocation3 [shape = 'u8[1024]{0}', space=vmem, size = 0x400, scoped, tag = 'output window, operand 0, single buffered']
    #allocation4 [shape = 's32[1]{0}', space=sflag, size = 0x4, scoped, tag = 'scoped memory for tpu_custom_call.1']
    %12 = vsyncpa [#allocation4], 0
    // Predicated region
    $region2: #{tpu_custom_call.1} parent=1 // pred_check
      _
    $region3: #{tpu_custom_call.1} parent=1 // pred_check_branch
      %14 = sbr.rel (0) target = $region5
    $region4: #{tpu_custom_call.1} parent=1 // pred_region
      _
    $region5: #{tpu_custom_call.1} parent=1 // pred_fallthru
      _
    // Predicated region
    $region6: #{tpu_custom_call.1} parent=1 // pred_check
      _
    $region7: #{tpu_custom_call.1} parent=1 // pred_check_branch
      %16 = sbr.rel (0) target = $region9
    $region8: #{tpu_custom_call.1} parent=1 // pred_region
      _
    $region9: #{tpu_custom_call.1} parent=1 // pred_fallthru
      _
    // Predicated region
    $region10: #{tpu_custom_call.1} parent=1 // pred_check
      _
    $region11: #{tpu_custom_call.1} parent=1 // pred_check_branch
      %18 = sbr.rel (0) target = $region13
    $region12: #{tpu_custom_call.1} parent=1 // pred_region
      _
    $region13: #{tpu_custom_call.1} parent=1 // pred_fallthru
      _
    // Predicated region
    $region14: #{tpu_custom_call.1} parent=1 // pred_check
      _
    $region15: #{tpu_custom_call.1} parent=1 // pred_check_branch
      %20 = sbr.rel (0) target = $region17
    $region16: #{tpu_custom_call.1} parent=1 // pred_region
      _
    $region17: #{tpu_custom_call.1} parent=1 // pred_fallthru
      _
    // Predicated region
    $region18: #{tpu_custom_call.1} parent=1 // pred_check
      _
    $region19: #{tpu_custom_call.1} parent=1 // pred_check_branch
      %22 = sbr.rel (0) target = $region21
    $region20: #{tpu_custom_call.1} parent=1 // pred_region
      _
    $region21: #{tpu_custom_call.1} parent=1 // pred_fallthru
      _
    // Predicated region
    $region22: #{tpu_custom_call.1} parent=1 // pred_check
      _
    $region23: #{tpu_custom_call.1} parent=1 // pred_check_branch
      %24 = sbr.rel (0) target = $region25
    $region24: #{tpu_custom_call.1} parent=1 // pred_region
      _
    $region25: #{tpu_custom_call.1} parent=1 // pred_fallthru
      _
    // Predicated region
    $region26: #{tpu_custom_call.1} parent=1 // pred_check
      _
    $region27: #{tpu_custom_call.1} parent=1 // pred_check_branch
      %26 = sbr.rel (0) target = $region29
    $region28: #{tpu_custom_call.1} parent=1 // pred_region
      _
    $region29: #{tpu_custom_call.1} parent=1 // pred_fallthru
      _
    %v28 = vld [vmem:[%s0] sm:$0xff]
    %v29 = vld [vmem:[%s0 + $0x8] sm:$0xff]
    %v30 = vld [vmem:[%s0 + $0x10] sm:$0xff]
    %v31 = vld [vmem:[%s0 + $0x18] sm:$0xff]
    %v32 = vld [vmem:[%s0 + $0x20] sm:$0xff]
    %v33 = vld [vmem:[%s0 + $0x28] sm:$0xff]
    %v34 = vld [vmem:[%s0 + $0x30] sm:$0xff]
    %v35 = vld [vmem:[%s0 + $0x38] sm:$0xff]
    %v36 = vld [vmem:[%s0 + $0x40] sm:$0xff]
    %v37 = vld [vmem:[%s0 + $0x48] sm:$0xff]
    %v38 = vld [vmem:[%s0 + $0x50] sm:$0xff]
    %v39 = vld [vmem:[%s0 + $0x58] sm:$0xff]
    %v40 = vld [vmem:[%s0 + $0x60] sm:$0xff]
    %v41 = vld [vmem:[%s0 + $0x68] sm:$0xff]
    %v42 = vld [vmem:[%s0 + $0x70] sm:$0xff]
    %v43 = vld [vmem:[%s0 + $0x78] sm:$0xff]
    %v44 = vld [vmem:[%s0 + $0x80] sm:$0xff]
    %v45 = vld [vmem:[%s0 + $0x88] sm:$0xff]
    %v46 = vld [vmem:[%s0 + $0x90] sm:$0xff]
    %v47 = vld [vmem:[%s0 + $0x98] sm:$0xff]
    %v48 = vld [vmem:[%s0 + $0xa0] sm:$0xff]
    %v49 = vld [vmem:[%s0 + $0xa8] sm:$0xff]
    %v50 = vld [vmem:[%s0 + $0xb0] sm:$0xff]
    %v51 = vld [vmem:[%s0 + $0xb8] sm:$0xff]
    %v52 = vld [vmem:[%s0 + $0xc0] sm:$0xff]
    %v53 = vld [vmem:[%s0 + $0xc8] sm:$0xff]
    %v54 = vld [vmem:[%s0 + $0xd0] sm:$0xff]
    %v55 = vld [vmem:[%s0 + $0xd8] sm:$0xff]
    %v56 = vld [vmem:[%s0 + $0xe0] sm:$0xff]
    %v57 = vld [vmem:[%s0 + $0xe8] sm:$0xff]
    %v58 = vld [vmem:[%s0 + $0xf0] sm:$0xff]
    %v59 = vld [vmem:[%s0 + $0xf8] sm:$0xff]
    %v60 = vld [vmem:[%s1] sm:$0x7]
    %v61 = vld [vmem:[%s2] sm:$0x1]
    %v63 = vperm.slane %v61, 0
    %vm65 = vcmask 23552
    %v67 = vsel %vm65, %v28, 0
    %v70 = vsel %vm65, %v29, 0
    %v73 = vsel %vm65, %v30, 0
    %v76 = vsel %vm65, %v31, 0
    %v79 = vsel %vm65, %v32, 0
    %v82 = vsel %vm65, %v33, 0
    %v85 = vsel %vm65, %v34, 0
    %v88 = vsel %vm65, %v35, 0
    %v91 = vsel %vm65, %v36, 0
    %v94 = vsel %vm65, %v37, 0
    %v97 = vsel %vm65, %v38, 0
    %v100 = vsel %vm65, %v39, 0
    %v103 = vsel %vm65, %v40, 0
    %v106 = vsel %vm65, %v41, 0
    %v109 = vsel %vm65, %v42, 0
    %v112 = vsel %vm65, %v43, 0
    %v115 = vsel %vm65, %v44, 0
    %v118 = vsel %vm65, %v45, 0
    %v121 = vsel %vm65, %v46, 0
    %v124 = vsel %vm65, %v47, 0
    %v127 = vsel %vm65, %v48, 0
    %v130 = vsel %vm65, %v49, 0
    %v133 = vsel %vm65, %v50, 0
    %v136 = vsel %vm65, %v51, 0
    %v139 = vsel %vm65, %v52, 0
    %v142 = vsel %vm65, %v53, 0
    %v145 = vsel %vm65, %v54, 0
    %v148 = vsel %vm65, %v55, 0
    %v151 = vsel %vm65, %v56, 0
    %v154 = vsel %vm65, %v57, 0
    %v157 = vsel %vm65, %v58, 0
    %v160 = vsel %vm65, %v59, 0
    %vm162 = vcmask 1042432
    %v164 = vsel %vm162, %v60, 0
    %166 = vmatpush.msra.mxu0 0.0
    %167 = vmatpush.msra.mxu0 0.0
    %168 = vmatpush.msra.mxu0 0.0
    %169 = vmatpush.msra.mxu0 0.0
    %170 = vmatpush.msra.mxu0 0.0
    %171 = vmatpush.msra.mxu0 0.0
    %172 = vmatpush.msra.mxu0 0.0
    %173 = vmatpush.msra.mxu0 0.0
    %174 = vmatpush.msra.mxu0 0.0
    %175 = vmatpush.msra.mxu0 0.0
    %176 = vmatpush.msra.mxu0 0.0
    %177 = vmatpush.msra.mxu0 0.0
    %178 = vmatpush.msra.mxu0 0.0
    %179 = vmatpush.msra.mxu0 0.0
    %180 = vmatpush.msra.mxu0 0.0
    %181 = vmatpush.msra.mxu0 %v164
    %182 = vmatmul.f32.gmra.mxu0 %v67
    %v183 = vpop.f32.mrf.mxu0
    %v184 = vadd.f32 %v63, %v183
    %185 = vmatmul.f32.gmra.mxu0 %v70
    %v186 = vpop.f32.mrf.mxu0
    %v187 = vadd.f32 %v63, %v186
    %188 = vmatmul.f32.gmra.mxu0 %v73
    %v189 = vpop.f32.mrf.mxu0
    %v190 = vadd.f32 %v63, %v189
    %191 = vmatmul.f32.gmra.mxu0 %v76
    %v192 = vpop.f32.mrf.mxu0
    %v193 = vadd.f32 %v63, %v192
    %194 = vmatmul.f32.gmra.mxu0 %v79
    %v195 = vpop.f32.mrf.mxu0
    %v196 = vadd.f32 %v63, %v195
    %197 = vmatmul.f32.gmra.mxu0 %v82
    %v198 = vpop.f32.mrf.mxu0
    %v199 = vadd.f32 %v63, %v198
    %200 = vmatmul.f32.gmra.mxu0 %v85
    %v201 = vpop.f32.mrf.mxu0
    %v202 = vadd.f32 %v63, %v201
    %203 = vmatmul.f32.gmra.mxu0 %v88
    %v204 = vpop.f32.mrf.mxu0
    %v205 = vadd.f32 %v63, %v204
    %206 = vmatmul.f32.gmra.mxu0 %v91
    %v207 = vpop.f32.mrf.mxu0
    %v208 = vadd.f32 %v63, %v207
    %209 = vmatmul.f32.gmra.mxu0 %v94
    %v210 = vpop.f32.mrf.mxu0
    %v211 = vadd.f32 %v63, %v210
    %212 = vmatmul.f32.gmra.mxu0 %v97
    %v213 = vpop.f32.mrf.mxu0
    %v214 = vadd.f32 %v63, %v213
    %215 = vmatmul.f32.gmra.mxu0 %v100
    %v216 = vpop.f32.mrf.mxu0
    %v217 = vadd.f32 %v63, %v216
    %218 = vmatmul.f32.gmra.mxu0 %v103
    %v219 = vpop.f32.mrf.mxu0
    %v220 = vadd.f32 %v63, %v219
    %221 = vmatmul.f32.gmra.mxu0 %v106
    %v222 = vpop.f32.mrf.mxu0
    %v223 = vadd.f32 %v63, %v222
    %224 = vmatmul.f32.gmra.mxu0 %v109
    %v225 = vpop.f32.mrf.mxu0
    %v226 = vadd.f32 %v63, %v225
    %227 = vmatmul.f32.gmra.mxu0 %v112
    %v228 = vpop.f32.mrf.mxu0
    %v229 = vadd.f32 %v63, %v228
    %230 = vmatmul.f32.gmra.mxu0 %v115
    %v231 = vpop.f32.mrf.mxu0
    %v232 = vadd.f32 %v63, %v231
    %233 = vmatmul.f32.gmra.mxu0 %v118
    %v234 = vpop.f32.mrf.mxu0
    %v235 = vadd.f32 %v63, %v234
    %236 = vmatmul.f32.gmra.mxu0 %v121
    %v237 = vpop.f32.mrf.mxu0
    %v238 = vadd.f32 %v63, %v237
    %239 = vmatmul.f32.gmra.mxu0 %v124
    %v240 = vpop.f32.mrf.mxu0
    %v241 = vadd.f32 %v63, %v240
    %242 = vmatmul.f32.gmra.mxu0 %v127
    %v243 = vpop.f32.mrf.mxu0
    %v244 = vadd.f32 %v63, %v243
    %245 = vmatmul.f32.gmra.mxu0 %v130
    %v246 = vpop.f32.mrf.mxu0
    %v247 = vadd.f32 %v63, %v246
    %248 = vmatmul.f32.gmra.mxu0 %v133
    %v249 = vpop.f32.mrf.mxu0
    %v250 = vadd.f32 %v63, %v249
    %251 = vmatmul.f32.gmra.mxu0 %v136
    %v252 = vpop.f32.mrf.mxu0
    %v253 = vadd.f32 %v63, %v252
    %254 = vmatmul.f32.gmra.mxu0 %v139
    %v255 = vpop.f32.mrf.mxu0
    %v256 = vadd.f32 %v63, %v255
    %257 = vmatmul.f32.gmra.mxu0 %v142
    %v258 = vpop.f32.mrf.mxu0
    %v259 = vadd.f32 %v63, %v258
    %260 = vmatmul.f32.gmra.mxu0 %v145
    %v261 = vpop.f32.mrf.mxu0
    %v262 = vadd.f32 %v63, %v261
    %263 = vmatmul.f32.gmra.mxu0 %v148
    %v264 = vpop.f32.mrf.mxu0
    %v265 = vadd.f32 %v63, %v264
    %266 = vmatmul.f32.gmra.mxu0 %v151
    %v267 = vpop.f32.mrf.mxu0
    %v268 = vadd.f32 %v63, %v267
    %269 = vmatmul.f32.gmra.mxu0 %v154
    %v270 = vpop.f32.mrf.mxu0
    %v271 = vadd.f32 %v63, %v270
    %272 = vmatmul.f32.gmra.mxu0 %v157
    %v273 = vpop.f32.mrf.mxu0
    %v274 = vadd.f32 %v63, %v273
    %275 = vmatmul.f32.gmra.mxu0 %v160
    %v276 = vpop.f32.mrf.mxu0
    %v277 = vadd.f32 %v63, %v276
    %278 = vdwg.mxu0
    %v279 = vmax.f32 %v184, 0.0
    %v280 = vmax.f32 %v187, 0.0
    %v281 = vmax.f32 %v190, 0.0
    %v282 = vmax.f32 %v193, 0.0
    %v283 = vmax.f32 %v196, 0.0
    %v284 = vmax.f32 %v199, 0.0
    %v285 = vmax.f32 %v202, 0.0
    %v286 = vmax.f32 %v205, 0.0
    %v287 = vmax.f32 %v208, 0.0
    %v288 = vmax.f32 %v211, 0.0
    %v289 = vmax.f32 %v214, 0.0
    %v290 = vmax.f32 %v217, 0.0
    %v291 = vmax.f32 %v220, 0.0
    %v292 = vmax.f32 %v223, 0.0
    %v293 = vmax.f32 %v226, 0.0
    %v294 = vmax.f32 %v229, 0.0
    %v295 = vmax.f32 %v232, 0.0
    %v296 = vmax.f32 %v235, 0.0
    %v297 = vmax.f32 %v238, 0.0
    %v298 = vmax.f32 %v241, 0.0
    %v299 = vmax.f32 %v244, 0.0
    %v300 = vmax.f32 %v247, 0.0
    %v301 = vmax.f32 %v250, 0.0
    %v302 = vmax.f32 %v253, 0.0
    %v303 = vmax.f32 %v256, 0.0
    %v304 = vmax.f32 %v259, 0.0
    %v305 = vmax.f32 %v262, 0.0
    %v306 = vmax.f32 %v265, 0.0
    %v307 = vmax.f32 %v268, 0.0
    %v308 = vmax.f32 %v271, 0.0
    %v309 = vmax.f32 %v274, 0.0
    %v310 = vmax.f32 %v277, 0.0
    %v311 = vpack.c.bf16 %v280, %v279
    %v312 = vpack.c.bf16 %v282, %v281
    %v313 = vpack.c.bf16 %v284, %v283
    %v314 = vpack.c.bf16 %v286, %v285
    %v315 = vpack.c.bf16 %v288, %v287
    %v316 = vpack.c.bf16 %v290, %v289
    %v317 = vpack.c.bf16 %v292, %v291
    %v318 = vpack.c.bf16 %v294, %v293
    %v319 = vpack.c.bf16 %v296, %v295
    %v320 = vpack.c.bf16 %v298, %v297
    %v321 = vpack.c.bf16 %v300, %v299
    %v322 = vpack.c.bf16 %v302, %v301
    %v323 = vpack.c.bf16 %v304, %v303
    %v324 = vpack.c.bf16 %v306, %v305
    %v325 = vpack.c.bf16 %v308, %v307
    %v326 = vpack.c.bf16 %v310, %v309
    %v327 = vld [vmem:[%s3] sm:$0xf]
    %v328 = vld [vmem:[%s3 + $0x4] sm:$0xf]
    %v329 = vld [vmem:[%s3 + $0x8] sm:$0xf]
    %v330 = vld [vmem:[%s3 + $0xc] sm:$0xf]
    %v331 = vld [vmem:[%s3 + $0x10] sm:$0xf]
    %v332 = vld [vmem:[%s3 + $0x14] sm:$0xf]
    %v333 = vld [vmem:[%s3 + $0x18] sm:$0xf]
    %v334 = vld [vmem:[%s3 + $0x1c] sm:$0xf]
    %v335 = vld [vmem:[%s4] sm:$0x1]
    %v337 = vperm.slane %v335, 0
    %v347 = vunpack.c.l.b16 %v327
    %v348 = vunpack.c.l.b16 %v328
    %v349 = vunpack.c.l.b16 %v329
    %v350 = vunpack.c.l.b16 %v330
    %v351 = vunpack.c.l.b16 %v331
    %v352 = vunpack.c.l.b16 %v332
    %v353 = vunpack.c.l.b16 %v333
    %v354 = vunpack.c.l.b16 %v334
    %v355 = vpack.c.b16 %v348, %v347
    %v356 = vpack.c.b16 %v350, %v349
    %v357 = vpack.c.b16 %v352, %v351
    %v358 = vpack.c.b16 %v354, %v353
    %vm363 = vcmask 523264
    %v365 = vsel %vm363, %v311, 0
    %v368 = vsel %vm363, %v312, 0
    %v371 = vsel %vm363, %v313, 0
    %v374 = vsel %vm363, %v314, 0
    %v377 = vsel %vm363, %v315, 0
    %v380 = vsel %vm363, %v316, 0
    %v383 = vsel %vm363, %v317, 0
    %v386 = vsel %vm363, %v318, 0
    %v389 = vsel %vm363, %v319, 0
    %v392 = vsel %vm363, %v320, 0
    %v395 = vsel %vm363, %v321, 0
    %v398 = vsel %vm363, %v322, 0
    %v401 = vsel %vm363, %v323, 0
    %v404 = vsel %vm363, %v324, 0
    %v407 = vsel %vm363, %v325, 0
    %v410 = vsel %vm363, %v326, 0
    %412 = vmatpush.bf16.msra.mxu0 0
    %413 = vmatpush.bf16.msra.mxu0 0
    %414 = vmatpush.bf16.msra.mxu0 0
    %415 = vmatpush.bf16.msra.mxu0 0
    %416 = vmatpush.bf16.msra.mxu0 %v358
    %417 = vmatpush.bf16.msra.mxu0 %v357
    %418 = vmatpush.bf16.msra.mxu0 %v356
    %419 = vmatpush.bf16.msra.mxu0 %v355
    %420 = vmatmul.bf16.gmra.mxu0 %v365
    %v421 = vpop.f32.mrf.mxu0
    %v422 = vadd.f32 %v337, %v421
    %v423 = vpop.f32.mrf.mxu0
    %v424 = vadd.f32 %v337, %v423
    %425 = vmatmul.bf16.gmra.mxu0 %v368
    %v426 = vpop.f32.mrf.mxu0
    %v427 = vadd.f32 %v337, %v426
    %v428 = vpop.f32.mrf.mxu0
    %v429 = vadd.f32 %v337, %v428
    %430 = vmatmul.bf16.gmra.mxu0 %v371
    %v431 = vpop.f32.mrf.mxu0
    %v432 = vadd.f32 %v337, %v431
    %v433 = vpop.f32.mrf.mxu0
    %v434 = vadd.f32 %v337, %v433
    %435 = vmatmul.bf16.gmra.mxu0 %v374
    %v436 = vpop.f32.mrf.mxu0
    %v437 = vadd.f32 %v337, %v436
    %v438 = vpop.f32.mrf.mxu0
    %v439 = vadd.f32 %v337, %v438
    %440 = vmatmul.bf16.gmra.mxu0 %v377
    %v441 = vpop.f32.mrf.mxu0
    %v442 = vadd.f32 %v337, %v441
    %v443 = vpop.f32.mrf.mxu0
    %v444 = vadd.f32 %v337, %v443
    %445 = vmatmul.bf16.gmra.mxu0 %v380
    %v446 = vpop.f32.mrf.mxu0
    %v447 = vadd.f32 %v337, %v446
    %v448 = vpop.f32.mrf.mxu0
    %v449 = vadd.f32 %v337, %v448
    %450 = vmatmul.bf16.gmra.mxu0 %v383
    %v451 = vpop.f32.mrf.mxu0
    %v452 = vadd.f32 %v337, %v451
    %v453 = vpop.f32.mrf.mxu0
    %v454 = vadd.f32 %v337, %v453
    %455 = vmatmul.bf16.gmra.mxu0 %v386
    %v456 = vpop.f32.mrf.mxu0
    %v457 = vadd.f32 %v337, %v456
    %v458 = vpop.f32.mrf.mxu0
    %v459 = vadd.f32 %v337, %v458
    %460 = vmatmul.bf16.gmra.mxu0 %v389
    %v461 = vpop.f32.mrf.mxu0
    %v462 = vadd.f32 %v337, %v461
    %v463 = vpop.f32.mrf.mxu0
    %v464 = vadd.f32 %v337, %v463
    %465 = vmatmul.bf16.gmra.mxu0 %v392
    %v466 = vpop.f32.mrf.mxu0
    %v467 = vadd.f32 %v337, %v466
    %v468 = vpop.f32.mrf.mxu0
    %v469 = vadd.f32 %v337, %v468
    %470 = vmatmul.bf16.gmra.mxu0 %v395
    %v471 = vpop.f32.mrf.mxu0
    %v472 = vadd.f32 %v337, %v471
    %v473 = vpop.f32.mrf.mxu0
    %v474 = vadd.f32 %v337, %v473
    %475 = vmatmul.bf16.gmra.mxu0 %v398
    %v476 = vpop.f32.mrf.mxu0
    %v477 = vadd.f32 %v337, %v476
    %v478 = vpop.f32.mrf.mxu0
    %v479 = vadd.f32 %v337, %v478
    %480 = vmatmul.bf16.gmra.mxu0 %v401
    %v481 = vpop.f32.mrf.mxu0
    %v482 = vadd.f32 %v337, %v481
    %v483 = vpop.f32.mrf.mxu0
    %v484 = vadd.f32 %v337, %v483
    %485 = vmatmul.bf16.gmra.mxu0 %v404
    %v486 = vpop.f32.mrf.mxu0
    %v487 = vadd.f32 %v337, %v486
    %v488 = vpop.f32.mrf.mxu0
    %v489 = vadd.f32 %v337, %v488
    %490 = vmatmul.bf16.gmra.mxu0 %v407
    %v491 = vpop.f32.mrf.mxu0
    %v492 = vadd.f32 %v337, %v491
    %v493 = vpop.f32.mrf.mxu0
    %v494 = vadd.f32 %v337, %v493
    %495 = vmatmul.bf16.gmra.mxu0 %v410
    %v496 = vpop.f32.mrf.mxu0
    %v497 = vadd.f32 %v337, %v496
    %v498 = vpop.f32.mrf.mxu0
    %v499 = vadd.f32 %v337, %v498
    %500 = vdwg.mxu0
    %v501 = vmax.f32 %v422, 0.0
    %v502 = vmax.f32 %v424, 0.0
    %v503 = vmax.f32 %v427, 0.0
    %v504 = vmax.f32 %v429, 0.0
    %v505 = vmax.f32 %v432, 0.0
    %v506 = vmax.f32 %v434, 0.0
    %v507 = vmax.f32 %v437, 0.0
    %v508 = vmax.f32 %v439, 0.0
    %v509 = vmax.f32 %v442, 0.0
    %v510 = vmax.f32 %v444, 0.0
    %v511 = vmax.f32 %v447, 0.0
    %v512 = vmax.f32 %v449, 0.0
    %v513 = vmax.f32 %v452, 0.0
    %v514 = vmax.f32 %v454, 0.0
    %v515 = vmax.f32 %v457, 0.0
    %v516 = vmax.f32 %v459, 0.0
    %v517 = vmax.f32 %v462, 0.0
    %v518 = vmax.f32 %v464, 0.0
    %v519 = vmax.f32 %v467, 0.0
    %v520 = vmax.f32 %v469, 0.0
    %v521 = vmax.f32 %v472, 0.0
    %v522 = vmax.f32 %v474, 0.0
    %v523 = vmax.f32 %v477, 0.0
    %v524 = vmax.f32 %v479, 0.0
    %v525 = vmax.f32 %v482, 0.0
    %v526 = vmax.f32 %v484, 0.0
    %v527 = vmax.f32 %v487, 0.0
    %v528 = vmax.f32 %v489, 0.0
    %v529 = vmax.f32 %v492, 0.0
    %v530 = vmax.f32 %v494, 0.0
    %v531 = vmax.f32 %v497, 0.0
    %v532 = vmax.f32 %v499, 0.0
    %v533 = vpack.c.bf16 %v502, %v501
    %v534 = vpack.c.bf16 %v504, %v503
    %v535 = vpack.c.bf16 %v506, %v505
    %v536 = vpack.c.bf16 %v508, %v507
    %v537 = vpack.c.bf16 %v510, %v509
    %v538 = vpack.c.bf16 %v512, %v511
    %v539 = vpack.c.bf16 %v514, %v513
    %v540 = vpack.c.bf16 %v516, %v515
    %v541 = vpack.c.bf16 %v518, %v517
    %v542 = vpack.c.bf16 %v520, %v519
    %v543 = vpack.c.bf16 %v522, %v521
    %v544 = vpack.c.bf16 %v524, %v523
    %v545 = vpack.c.bf16 %v526, %v525
    %v546 = vpack.c.bf16 %v528, %v527
    %v547 = vpack.c.bf16 %v530, %v529
    %v548 = vpack.c.bf16 %v532, %v531
    %v549 = vld [vmem:[%s5] sm:$0xf]
    %v550 = vld [vmem:[%s5 + $0x4] sm:$0xf]
    %v551 = vld [vmem:[%s5 + $0x8] sm:$0xf]
    %v552 = vld [vmem:[%s5 + $0xc] sm:$0xf]
    %v553 = vld [vmem:[%s5 + $0x10] sm:$0xf]
    %v554 = vld [vmem:[%s5 + $0x14] sm:$0xf]
    %v555 = vld [vmem:[%s5 + $0x18] sm:$0xf]
    %v556 = vld [vmem:[%s5 + $0x1c] sm:$0xf]
    %v557 = vld [vmem:[%s5 + $0x20] sm:$0xf]
    %v558 = vld [vmem:[%s5 + $0x24] sm:$0xf]
    %v559 = vld [vmem:[%s5 + $0x28] sm:$0xf]
    %v560 = vld [vmem:[%s5 + $0x2c] sm:$0xf]
    %v561 = vld [vmem:[%s5 + $0x30] sm:$0xf]
    %v562 = vld [vmem:[%s5 + $0x34] sm:$0xf]
    %v563 = vld [vmem:[%s5 + $0x38] sm:$0xf]
    %v564 = vld [vmem:[%s5 + $0x3c] sm:$0xf]
    %v565 = vld [vmem:[%s6] sm:$0x1]
    %v567 = vperm.slane %v565, 0
    %v585 = vunpack.c.l.b16 %v549
    %v586 = vunpack.c.l.b16 %v550
    %v587 = vunpack.c.l.b16 %v551
    %v588 = vunpack.c.l.b16 %v552
    %v589 = vunpack.c.l.b16 %v553
    %v590 = vunpack.c.l.b16 %v554
    %v591 = vunpack.c.l.b16 %v555
    %v592 = vunpack.c.l.b16 %v556
    %v593 = vunpack.c.l.b16 %v557
    %v594 = vunpack.c.l.b16 %v558
    %v595 = vunpack.c.l.b16 %v559
    %v596 = vunpack.c.l.b16 %v560
    %v597 = vunpack.c.l.b16 %v561
    %v598 = vunpack.c.l.b16 %v562
    %v599 = vunpack.c.l.b16 %v563
    %v600 = vunpack.c.l.b16 %v564
    %v601 = vpack.c.b16 %v586, %v585
    %v602 = vpack.c.b16 %v588, %v587
    %v603 = vpack.c.b16 %v590, %v589
    %v604 = vpack.c.b16 %v592, %v591
    %v605 = vpack.c.b16 %v594, %v593
    %v606 = vpack.c.b16 %v596, %v595
    %v607 = vpack.c.b16 %v598, %v597
    %v608 = vpack.c.b16 %v600, %v599
    %617 = vmatpush.bf16.msra.mxu0 %v608
    %618 = vmatpush.bf16.msra.mxu0 %v607
    %619 = vmatpush.bf16.msra.mxu0 %v606
    %620 = vmatpush.bf16.msra.mxu0 %v605
    %621 = vmatpush.bf16.msra.mxu0 %v604
    %622 = vmatpush.bf16.msra.mxu0 %v603
    %623 = vmatpush.bf16.msra.mxu0 %v602
    %624 = vmatpush.bf16.msra.mxu0 %v601
    %625 = vmatmul.bf16.gmra.mxu0 %v533
    %v626 = vpop.f32.mrf.mxu0
    %v627 = vadd.f32 %v567, %v626
    %v628 = vpop.f32.mrf.mxu0
    %v629 = vadd.f32 %v567, %v628
    %630 = vmatmul.bf16.gmra.mxu0 %v534
    %v631 = vpop.f32.mrf.mxu0
    %v632 = vadd.f32 %v567, %v631
    %v633 = vpop.f32.mrf.mxu0
    %v634 = vadd.f32 %v567, %v633
    %635 = vmatmul.bf16.gmra.mxu0 %v535
    %v636 = vpop.f32.mrf.mxu0
    %v637 = vadd.f32 %v567, %v636
    %v638 = vpop.f32.mrf.mxu0
    %v639 = vadd.f32 %v567, %v638
    %640 = vmatmul.bf16.gmra.mxu0 %v536
    %v641 = vpop.f32.mrf.mxu0
    %v642 = vadd.f32 %v567, %v641
    %v643 = vpop.f32.mrf.mxu0
    %v644 = vadd.f32 %v567, %v643
    %645 = vmatmul.bf16.gmra.mxu0 %v537
    %v646 = vpop.f32.mrf.mxu0
    %v647 = vadd.f32 %v567, %v646
    %v648 = vpop.f32.mrf.mxu0
    %v649 = vadd.f32 %v567, %v648
    %650 = vmatmul.bf16.gmra.mxu0 %v538
    %v651 = vpop.f32.mrf.mxu0
    %v652 = vadd.f32 %v567, %v651
    %v653 = vpop.f32.mrf.mxu0
    %v654 = vadd.f32 %v567, %v653
    %655 = vmatmul.bf16.gmra.mxu0 %v539
    %v656 = vpop.f32.mrf.mxu0
    %v657 = vadd.f32 %v567, %v656
    %v658 = vpop.f32.mrf.mxu0
    %v659 = vadd.f32 %v567, %v658
    %660 = vmatmul.bf16.gmra.mxu0 %v540
    %v661 = vpop.f32.mrf.mxu0
    %v662 = vadd.f32 %v567, %v661
    %v663 = vpop.f32.mrf.mxu0
    %v664 = vadd.f32 %v567, %v663
    %665 = vmatmul.bf16.gmra.mxu0 %v541
    %v666 = vpop.f32.mrf.mxu0
    %v667 = vadd.f32 %v567, %v666
    %v668 = vpop.f32.mrf.mxu0
    %v669 = vadd.f32 %v567, %v668
    %670 = vmatmul.bf16.gmra.mxu0 %v542
    %v671 = vpop.f32.mrf.mxu0
    %v672 = vadd.f32 %v567, %v671
    %v673 = vpop.f32.mrf.mxu0
    %v674 = vadd.f32 %v567, %v673
    %675 = vmatmul.bf16.gmra.mxu0 %v543
    %v676 = vpop.f32.mrf.mxu0
    %v677 = vadd.f32 %v567, %v676
    %v678 = vpop.f32.mrf.mxu0
    %v679 = vadd.f32 %v567, %v678
    %680 = vmatmul.bf16.gmra.mxu0 %v544
    %v681 = vpop.f32.mrf.mxu0
    %v682 = vadd.f32 %v567, %v681
    %v683 = vpop.f32.mrf.mxu0
    %v684 = vadd.f32 %v567, %v683
    %685 = vmatmul.bf16.gmra.mxu0 %v545
    %v686 = vpop.f32.mrf.mxu0
    %v687 = vadd.f32 %v567, %v686
    %v688 = vpop.f32.mrf.mxu0
    %v689 = vadd.f32 %v567, %v688
    %690 = vmatmul.bf16.gmra.mxu0 %v546
    %v691 = vpop.f32.mrf.mxu0
    %v692 = vadd.f32 %v567, %v691
    %v693 = vpop.f32.mrf.mxu0
    %v694 = vadd.f32 %v567, %v693
    %695 = vmatmul.bf16.gmra.mxu0 %v547
    %v696 = vpop.f32.mrf.mxu0
    %v697 = vadd.f32 %v567, %v696
    %v698 = vpop.f32.mrf.mxu0
    %v699 = vadd.f32 %v567, %v698
    %700 = vmatmul.bf16.gmra.mxu0 %v548
    %v701 = vpop.f32.mrf.mxu0
    %v702 = vadd.f32 %v567, %v701
    %v703 = vpop.f32.mrf.mxu0
    %v704 = vadd.f32 %v567, %v703
    %705 = vdwg.mxu0
    %v706 = vmax.f32 %v627, 0.0
    %v707 = vmax.f32 %v629, 0.0
    %v708 = vmax.f32 %v632, 0.0
    %v709 = vmax.f32 %v634, 0.0
    %v710 = vmax.f32 %v637, 0.0
    %v711 = vmax.f32 %v639, 0.0
    %v712 = vmax.f32 %v642, 0.0
    %v713 = vmax.f32 %v644, 0.0
    %v714 = vmax.f32 %v647, 0.0
    %v715 = vmax.f32 %v649, 0.0
    %v716 = vmax.f32 %v652, 0.0
    %v717 = vmax.f32 %v654, 0.0
    %v718 = vmax.f32 %v657, 0.0
    %v719 = vmax.f32 %v659, 0.0
    %v720 = vmax.f32 %v662, 0.0
    %v721 = vmax.f32 %v664, 0.0
    %v722 = vmax.f32 %v667, 0.0
    %v723 = vmax.f32 %v669, 0.0
    %v724 = vmax.f32 %v672, 0.0
    %v725 = vmax.f32 %v674, 0.0
    %v726 = vmax.f32 %v677, 0.0
    %v727 = vmax.f32 %v679, 0.0
    %v728 = vmax.f32 %v682, 0.0
    %v729 = vmax.f32 %v684, 0.0
    %v730 = vmax.f32 %v687, 0.0
    %v731 = vmax.f32 %v689, 0.0
    %v732 = vmax.f32 %v692, 0.0
    %v733 = vmax.f32 %v694, 0.0
    %v734 = vmax.f32 %v697, 0.0
    %v735 = vmax.f32 %v699, 0.0
    %v736 = vmax.f32 %v702, 0.0
    %v737 = vmax.f32 %v704, 0.0
    %v738 = vmax.f32 %v706, %v708
    %v739 = vmax.f32 %v707, %v709
    %v740 = vmax.f32 %v738, %v710
    %v741 = vmax.f32 %v739, %v711
    %v742 = vmax.f32 %v740, %v712
    %v743 = vmax.f32 %v741, %v713
    %v744 = vmax.f32 %v742, %v714
    %v745 = vmax.f32 %v743, %v715
    %v746 = vmax.f32 %v744, %v716
    %v747 = vmax.f32 %v745, %v717
    %v748 = vmax.f32 %v746, %v718
    %v749 = vmax.f32 %v747, %v719
    %v750 = vmax.f32 %v748, %v720
    %v751 = vmax.f32 %v749, %v721
    %v752 = vmax.f32 %v750, %v751
    %v753 = vrot.slane %v752, 4
    %v754 = vmax.f32 %v752, %v753
    %v755 = vrot.slane %v754, 2
    %v756 = vmax.f32 %v754, %v755
    %v757 = vrot.slane %v756, 1
    %v758 = vmax.f32 %v756, %v757
    %v759 = vmax.f32 %v722, %v724
    %v760 = vmax.f32 %v723, %v725
    %v761 = vmax.f32 %v759, %v726
    %v762 = vmax.f32 %v760, %v727
    %v763 = vmax.f32 %v761, %v728
    %v764 = vmax.f32 %v762, %v729
    %v765 = vmax.f32 %v763, %v730
    %v766 = vmax.f32 %v764, %v731
    %v767 = vmax.f32 %v765, %v732
    %v768 = vmax.f32 %v766, %v733
    %v769 = vmax.f32 %v767, %v734
    %v770 = vmax.f32 %v768, %v735
    %v771 = vmax.f32 %v769, %v736
    %v772 = vmax.f32 %v770, %v737
    %v773 = vmax.f32 %v771, %v772
    %v774 = vrot.slane %v773, 4
    %v775 = vmax.f32 %v773, %v774
    %v776 = vrot.slane %v775, 2
    %v777 = vmax.f32 %v775, %v776
    %v778 = vrot.slane %v777, 1
    %v779 = vmax.f32 %v777, %v778
    %p780 = scmp.eq.s32.totalorder 0, 0
    // Predicated region
    $region30: #{tpu_custom_call.1} parent=1 // pred_check
      %p781 = pneg %p780
    $region31: #{tpu_custom_call.1} parent=1 // pred_check_branch
      %783 = sbr.rel (%p781) target = $region33
    $region32: #{tpu_custom_call.1} parent=1 // pred_region
      %784 = vst [vmem:[#allocation2] sm:$0x3] -inf
    $region33: #{tpu_custom_call.1} parent=1 // pred_fallthru
      _
    %v785 = vld [vmem:[#allocation2] sm:$0x3]
    %vm788 = vcmask 1041409
    %v789 = vsel %vm788, %v779, %v758
    %v791 = vmax.f32 %v785, %v789
    %792 = vst [vmem:[#allocation2] sm:$0x3] %v791
    // Predicated region
    $region34: #{tpu_custom_call.1} parent=1 // pred_check
      %p793 = pneg %p780
    $region35: #{tpu_custom_call.1} parent=1 // pred_check_branch
      %795 = sbr.rel (%p793) target = $region37
    $region36: #{tpu_custom_call.1} parent=1 // pred_region
      %v796 = vld [vmem:[#allocation2] sm:$0x3]
      %797 = vst [vmem:[#allocation3] sm:$0x3] %v796
    $region37: #{tpu_custom_call.1} parent=1 // pred_fallthru
      _
    // Predicated region
    $region38: #{tpu_custom_call.1} parent=1 // pred_check
      _
    $region39: #{tpu_custom_call.1} parent=1 // pred_check_branch
      %799 = sbr.rel (0) target = $region41
    $region40: #{tpu_custom_call.1} parent=1 // pred_region
      %801 = vsyncadd [#allocation4], 0
      %s803 = sshll.u32 [#allocation3], 4
      %s804 = int_to_ptr.vmem [resolvable:$true] %s803
      %s805 = sshll.u32 %s7, 4
      %s806 = int_to_ptr.hbm [resolvable:$true] %s805
      %808 = dma.vmem_to_hbm [thread:$0]  %s804, 32, %s806, [#allocation4]
    $region41: #{tpu_custom_call.1} parent=1 // pred_fallthru
      _
    // Predicated region
    $region42: #{tpu_custom_call.1} parent=1 // pred_check
      _
    $region43: #{tpu_custom_call.1} parent=1 // pred_check_branch
      %810 = sbr.rel (0) target = $region45
    $region44: #{tpu_custom_call.1} parent=1 // pred_region
      %812 = dma.done [#allocation4], 32
    $region45: #{tpu_custom_call.1} parent=1 // pred_fallthru
      _
    %813 = vsyncpa [#allocation4], 1

</llo_original>
